<compile_context>
chip_gen: v6e
topology: v6e:2x2x1
jax: 0.10.0
libtpu: 0.0.40
codegen_flags: <defaults>
</compile_context>

<pallas_src>
import functools

import jax
import jax.numpy as jnp
from jax import lax
from jax.experimental import pallas as pl
from jax.experimental.pallas import tpu as pltpu

LN_EPS = 1e-5          # torch.nn.LayerNorm default
_NEG_BIG = -1e30       # finite "-inf" (avoids inf-inf NaNs in masked softmax)


def _round_up(v, m):
    return ((v + m - 1) // m) * m


def _vmem_ceiling_bytes():
    """Generation-aware VMEM budget (leave ~22% headroom for compiler scratch)."""
    cap = 64 << 20                                    # conservative fallback (v7x-sized)
    try:
        info = pltpu.get_tpu_info()
        cap = int(getattr(info, "vmem_capacity_bytes", cap)) or cap
    except Exception:
        pass
    return (cap * 25) // 32                           # ~50 MiB on v7x, ~100 MiB on v5e/v6e


def _refined_recip(s):
    r = pl.reciprocal(s, approx=True)                 # EUP estimate (free slot)
    return r * (2.0 - s * r)                          # one Newton step -> ~f32 accuracy


def _channel_weight(xa, wv_w, wv_b, wz_w, wz_b, gamma, beta):
    """(C,1) attention-pooled descriptor -> sigmoid(LayerNorm(wz(wv(.)))) gate."""
    z = jnp.dot(wv_w, xa, preferred_element_type=jnp.float32) + wv_b       # (C/2, 1)
    wz = jnp.dot(wz_w, z, preferred_element_type=jnp.float32) + wz_b       # (C, 1)
    mu = jnp.mean(wz, axis=0, keepdims=True)
    var = jnp.mean((wz - mu) * (wz - mu), axis=0, keepdims=True)
    normed = (wz - mu) * lax.rsqrt(var + LN_EPS)
    return jax.nn.sigmoid(normed * gamma + beta)                           # (C, 1) f32


# ----------------------------------------------------------------------------
# single-block path: one (folded-batch) x block per grid step
# ----------------------------------------------------------------------------
def _make_single_kernel(bt, hw_true, hwp):
    need_mask = hwp != hw_true

    def kernel(x_ref, wq_w_ref, wq_b_ref, wv_w_ref, wv_b_ref,
               wz_w_ref, wz_b_ref, gamma_ref, beta_ref, o_ref):
        x_dtype = o_ref.dtype
        # tiny cast so the logit matmul consumes native-dtype x (no f32 x temp for bf16)
        wq_w = wq_w_ref[...].astype(x_dtype)            # (1, C)
        wq_b = wq_b_ref[...]                            # (1, 1) f32
        wv_w = wv_w_ref[...]
        wv_b = wv_b_ref[...]
        wz_w = wz_w_ref[...]
        wz_b = wz_b_ref[...]
        gamma = gamma_ref[...]
        beta = beta_ref[...]

        if need_mask:
            lane = lax.broadcasted_iota(jnp.int32, (1, hwp), 1)
            pad_mask = lane < hw_true

        for b in range(bt):                             # static unroll, bt <= 8
            xb = x_ref[b]                               # (C, HWp) native dtype
            # spatial-attention logits: single streaming MXU pass of x
            logits = jnp.dot(wq_w, xb, preferred_element_type=jnp.float32) + wq_b
            if need_mask:
                logits = jnp.where(pad_mask, logits, _NEG_BIG)
            m = jnp.max(logits, axis=-1, keepdims=True)
            e = jnp.exp(logits - m)
            s = jnp.sum(e, axis=-1, keepdims=True)
            attn = e * _refined_recip(s)                # (1, HWp) f32, sums to 1

            # reassociated contraction: xa = x @ attn^T (VPU mul + lane reduce)
            xa = jnp.sum(xb.astype(jnp.float32) * attn, axis=-1, keepdims=True)
            weight = _channel_weight(xa, wv_w, wv_b, wz_w, wz_b, gamma, beta)

            # channel re-weighting in the caller's dtype (bf16 VALU on v6e/v7x)
            o_ref[b] = xb * weight.astype(x_dtype)

    return kernel


# ----------------------------------------------------------------------------
# tiled two-pass path: pass 1 = online-softmax stats + channel gate, pass 2 = apply
# ----------------------------------------------------------------------------
def _make_stats_kernel(hw_true, ts):
    def kernel(x_ref, wq_wt_ref, wq_b_ref, wv_w_ref, wv_b_ref,
               wz_w_ref, wz_b_ref, gamma_ref, beta_ref, w_out_ref,
               m_sc, l_sc, acc_sc):
        t = pl.program_id(1)
        n_t = pl.num_programs(1)

        @pl.when(t == 0)
        def _():
            m_sc[...] = jnp.full(m_sc.shape, _NEG_BIG, jnp.float32)
            l_sc[...] = jnp.zeros(l_sc.shape, jnp.float32)
            acc_sc[...] = jnp.zeros(acc_sc.shape, jnp.float32)

        xt = x_ref[0].astype(jnp.float32)               # (C, ts)
        # logits via VPU broadcast-multiply + XLU cross-sublane reduce
        # (avoids a degenerate-M MXU pass in the inner tile loop)
        logits = jnp.sum(xt * wq_wt_ref[...], axis=0, keepdims=True) + wq_b_ref[...]
        lane = lax.broadcasted_iota(jnp.int32, (1, ts), 1) + t * ts
        logits = jnp.where(lane < hw_true, logits, _NEG_BIG)

        m_prev = m_sc[...]
        m_new = jnp.maximum(m_prev, jnp.max(logits, axis=-1, keepdims=True))
        alpha = jnp.exp(m_prev - m_new)                 # (1, 1)
        p = jnp.exp(logits - m_new)                     # (1, ts); padded lanes -> 0
        l_sc[...] = alpha * l_sc[...] + jnp.sum(p, axis=-1, keepdims=True)
        acc_sc[...] = alpha * acc_sc[...] + jnp.sum(xt * p, axis=-1, keepdims=True)
        m_sc[...] = m_new

        @pl.when(t == n_t - 1)
        def _():
            xa = acc_sc[...] * _refined_recip(l_sc[...])            # (C, 1)
            w_out_ref[0] = _channel_weight(
                xa, wv_w_ref[...], wv_b_ref[...], wz_w_ref[...],
                wz_b_ref[...], gamma_ref[...], beta_ref[...])

    return kernel


def _apply_kernel(x_ref, w_ref, o_ref):
    o_ref[0] = x_ref[0] * w_ref[0].astype(o_ref.dtype)


# ----------------------------------------------------------------------------
# wrapper
# ----------------------------------------------------------------------------
@functools.partial(jax.jit, static_argnames=("spatial_tile", "force_tiled"))
def psa_channel_forward(x, wv_w, wv_b, wq_w, wq_b, wz_w, wz_b, gamma, beta,
                        *, spatial_tile=None, force_tiled=False):
    bsz, c, h, w = x.shape
    hw = h * w
    itemsize = x.dtype.itemsize
    x3 = x.reshape(bsz, c, hw)                          # native-dtype HBM I/O

    f32 = jnp.float32
    wq_w = wq_w.astype(f32); wq_b = wq_b.astype(f32)
    wv_w = wv_w.astype(f32); wv_b = wv_b.astype(f32)
    wz_w = wz_w.astype(f32); wz_b = wz_b.astype(f32)
    gamma = gamma.astype(f32); beta = beta.astype(f32)

    vmem_ceiling = _vmem_ceiling_bytes()
    param_bytes = 4 * (wq_w.size + wq_b.size + wv_w.size + wv_b.size +
                       wz_w.size + wz_b.size + gamma.size + beta.size)

    # ---------------- path selection (trace-time, static) ----------------
    hwp = _round_up(hw, 128)                            # lane-dense spatial axis
    per_batch_native = c * hwp * itemsize
    per_batch_f32 = c * hwp * 4

    bt = 1                                              # batch folding for small blocks
    for d in range(min(bsz, 8), 0, -1):
        if bsz % d == 0 and d * per_batch_native <= (2 << 20):
            bt = d
            break

    # 2x double-buffered in + out blocks, plus budget for the f32 temps of the
    # xa reduction (covers bf16 inputs where the cast/product temp materializes).
    single_est = bt * (4 * per_batch_native + 2 * per_batch_f32) + param_bytes + (2 << 20)
    use_single = (not force_tiled) and single_est <= vmem_ceiling

    if use_single:
        # TODO(synk): fold the pad into in-kernel edge masking to avoid the extra
        # HBM copy when HW is not already a multiple of 128.
        xp = x3 if hwp == hw else jnp.pad(x3, ((0, 0), (0, 0), (0, hwp - hw)))
        vmem_limit = int(min(max(single_est, 32 << 20), vmem_ceiling))
        out = pl.pallas_call(
            _make_single_kernel(bt, hw, hwp),
            out_shape=jax.ShapeDtypeStruct((bsz, c, hwp), x.dtype),
            grid=(bsz // bt,),
            in_specs=[
                pl.BlockSpec((bt, c, hwp), lambda i: (i, 0, 0)),    # x
                pl.BlockSpec((1, c), lambda i: (0, 0)),             # wq_w
                pl.BlockSpec((1, 1), lambda i: (0, 0)),             # wq_b
                pl.BlockSpec((c // 2, c), lambda i: (0, 0)),        # wv_w
                pl.BlockSpec((c // 2, 1), lambda i: (0, 0)),        # wv_b
                pl.BlockSpec((c, c // 2), lambda i: (0, 0)),        # wz_w
                pl.BlockSpec((c, 1), lambda i: (0, 0)),             # wz_b
                pl.BlockSpec((c, 1), lambda i: (0, 0)),             # gamma
                pl.BlockSpec((c, 1), lambda i: (0, 0)),             # beta
            ],
            out_specs=pl.BlockSpec((bt, c, hwp), lambda i: (i, 0, 0)),
            compiler_params=pltpu.CompilerParams(
                dimension_semantics=("parallel",),
                vmem_limit_bytes=vmem_limit),
        )(xp, wq_w, wq_b, wv_w, wv_b, wz_w, wz_b, gamma, beta)
        return out[:, :, :hw].reshape(bsz, c, h, w)

    # -------- spatially tiled two-pass (online softmax) for large C*HW --------
    if spatial_tile is not None:
        ts = max(128, _round_up(int(spatial_tile), 128))
    else:
        ts = (2 << 20) // max(1, c * itemsize)          # ~2 MiB tiles
        ts = max(512, min(2048, ts))
        ts = max(128, (ts // 128) * 128)
    ts = min(ts, _round_up(hw, 128))
    hwp2 = _round_up(hw, ts)
    n_t = hwp2 // ts
    xp = x3 if hwp2 == hw else jnp.pad(x3, ((0, 0), (0, 0), (0, hwp2 - hw)))

    tile_native = c * ts * itemsize
    tile_f32 = c * ts * 4
    tiled_est = 4 * tile_native + 2 * tile_f32 + param_bytes + (2 << 20)
    vmem_limit = int(min(max(tiled_est, 32 << 20), vmem_ceiling))
    # TODO(synk): when B == 1 split the tile axis into per-core partial (m, l, xa)
    # accumulators so the second v7x TensorCore is not idle during pass 1.

    weight = pl.pallas_call(
        _make_stats_kernel(hw, ts),
        out_shape=jax.ShapeDtypeStruct((bsz, c, 1), jnp.float32),
        grid=(bsz, n_t),
        in_specs=[
            pl.BlockSpec((1, c, ts), lambda i, t: (i, 0, t)),       # x tile
            pl.BlockSpec((c, 1), lambda i, t: (0, 0)),              # wq_w^T (column form)
            pl.BlockSpec((1, 1), lambda i, t: (0, 0)),              # wq_b
            pl.BlockSpec((c // 2, c), lambda i, t: (0, 0)),         # wv_w
            pl.BlockSpec((c // 2, 1), lambda i, t: (0, 0)),         # wv_b
            pl.BlockSpec((c, c // 2), lambda i, t: (0, 0)),         # wz_w
            pl.BlockSpec((c, 1), lambda i, t: (0, 0)),              # wz_b
            pl.BlockSpec((c, 1), lambda i, t: (0, 0)),              # gamma
            pl.BlockSpec((c, 1), lambda i, t: (0, 0)),              # beta
        ],
        out_specs=pl.BlockSpec((1, c, 1), lambda i, t: (i, 0, 0)),
        scratch_shapes=[
            pltpu.VMEM((1, 1), jnp.float32),    # running max
            pltpu.VMEM((1, 1), jnp.float32),    # running softmax denom
            pltpu.VMEM((c, 1), jnp.float32),    # running xa accumulator
        ],
        compiler_params=pltpu.CompilerParams(
            dimension_semantics=("parallel", "arbitrary"),
            vmem_limit_bytes=vmem_limit),
    )(xp, wq_w.T, wq_b, wv_w, wv_b, wz_w, wz_b, gamma, beta)

    out = pl.pallas_call(
        _apply_kernel,
        out_shape=jax.ShapeDtypeStruct((bsz, c, hwp2), x.dtype),
        grid=(bsz, n_t),
        in_specs=[
            pl.BlockSpec((1, c, ts), lambda i, t: (i, 0, t)),
            pl.BlockSpec((1, c, 1), lambda i, t: (i, 0, 0)),
        ],
        out_specs=pl.BlockSpec((1, c, ts), lambda i, t: (i, 0, t)),
        compiler_params=pltpu.CompilerParams(
            dimension_semantics=("parallel", "parallel"),
            vmem_limit_bytes=vmem_limit),
    )(xp, weight)
    return out[:, :, :hw].reshape(bsz, c, h, w)


# ----------------------------------------------------------------------------
# pure-JAX reference + tests
# ----------------------------------------------------------------------------
def reference_forward(x, wv_w, wv_b, wq_w, wq_b, wz_w, wz_b, gamma, beta):
    b, c, h, w = x.shape
    hw = h * w
    xf = x.reshape(b, c, hw).astype(jnp.float32)
    wv = jnp.einsum('oc,bcs->bos', wv_w, xf) + wv_b[None, :, :]            # (b, c/2, hw)
    wq = jnp.einsum('oc,bcs->bos', wq_w, xf) + wq_b[None, :, :]            # (b, 1, hw)
    attn = jax.nn.softmax(wq, axis=-1)                                     # softmax over hw
    z = jnp.einsum('bos,bks->bok', wv, attn)                               # (b, c/2, 1)
    wz = jnp.einsum('oc,bck->bok', wz_w, z) + wz_b[None, :, :]             # (b, c, 1)
    mu = jnp.mean(wz, axis=1, keepdims=True)
    var = jnp.mean((wz - mu) ** 2, axis=1, keepdims=True)
    normed = (wz - mu) / jnp.sqrt(var + LN_EPS)
    weight = jax.nn.sigmoid(normed * gamma[None, :, :] + beta[None, :, :])
    return (weight * xf).reshape(b, c, h, w).astype(x.dtype)


def _make_params(key, c):
    k0, k1, k2, k3, k4, k5 = jax.random.split(key, 6)
    wv_w = 0.2 * jax.random.normal(k0, (c // 2, c), jnp.float32)
    wv_b = 0.1 * jax.random.normal(k1, (c // 2, 1), jnp.float32)
    wq_w = 0.2 * jax.random.normal(k2, (1, c), jnp.float32)
    wq_b = 0.1 * jax.random.normal(k3, (1, 1), jnp.float32)
    wz_w = 0.2 * jax.random.normal(k4, (c, c // 2), jnp.float32)
    wz_b = 0.1 * jax.random.normal(k5, (c, 1), jnp.float32)
    gamma = jnp.ones((c, 1), jnp.float32)                  # LayerNorm default init
    beta = jnp.zeros((c, 1), jnp.float32)
    return wv_w, wv_b, wq_w, wq_b, wz_w, wz_b, gamma, beta


def _check(x, params, atol, rtol, **kw):
    out = jax.block_until_ready(psa_channel_forward(x, *params, **kw))
    ref = reference_forward(x, *params)
    assert out.shape == x.shape and out.dtype == x.dtype
    err = float(jnp.max(jnp.abs(out.astype(jnp.float32) - ref.astype(jnp.float32))))
    assert jnp.allclose(out.astype(jnp.float32), ref.astype(jnp.float32),
                        atol=atol, rtol=rtol), f"mismatch vs reference (max abs err {err})"
    return out


if __name__ == "__main__":
    key = jax.random.PRNGKey(0)
    kx1, kp1, kx2, kp2, kx3, kp3, kx4, kp4 = jax.random.split(key, 8)

    # 1) main small case: single-block path, lane-aligned HW, folded batch
    x1 = jax.random.normal(kx1, (2, 4, 16, 16), jnp.float32)
    _check(x1, _make_params(kp1, 4), atol=1e-4, rtol=1e-4)

    # 2) HW not a multiple of 128 -> lane padding + masked softmax
    x2 = jax.random.normal(kx2, (3, 8, 12, 12), jnp.float32)
    _check(x2, _make_params(kp2, 8), atol=1e-4, rtol=1e-4)

    # 3) spatially tiled two-pass (online-softmax) path, forced at a small shape
    x3 = jax.random.normal(kx3, (2, 8, 20, 20), jnp.float32)
    _check(x3, _make_params(kp3, 8), atol=1e-4, rtol=1e-4,
           force_tiled=True, spatial_tile=128)

    # 4) bf16 I/O (native-dtype DMA, matmul and reweight; loose bf16 tolerance)
    x4 = jax.random.normal(kx4, (2, 16, 16, 16), jnp.float32).astype(jnp.bfloat16)
    _check(x4, _make_params(kp4, 16), atol=1e-1, rtol=1e-1)

    print("KERNEL_OK")
</pallas_src>

<mosaic_0001>
module attributes {stable_mosaic.version = 11 : i64} {
  func.func @kernel(%arg0: i32, %arg1: memref<2x4x256xf32, #tpu.memory_space<vmem>>, %arg2: memref<1x4xf32, #tpu.memory_space<vmem>>, %arg3: memref<1x1xf32, #tpu.memory_space<vmem>>, %arg4: memref<2x4xf32, #tpu.memory_space<vmem>>, %arg5: memref<2x1xf32, #tpu.memory_space<vmem>>, %arg6: memref<4x2xf32, #tpu.memory_space<vmem>>, %arg7: memref<4x1xf32, #tpu.memory_space<vmem>>, %arg8: memref<4x1xf32, #tpu.memory_space<vmem>>, %arg9: memref<4x1xf32, #tpu.memory_space<vmem>>, %arg10: memref<2x4x256xf32, #tpu.memory_space<vmem>>) attributes {dimension_semantics = [#tpu.dimension_semantics<parallel>], iteration_bounds = array<i64: 1>, scalar_prefetch = 0 : i64, scratch_operands = 0 : i64, tpu.core_type = #tpu.core_type<tc>, window_params = [{transform_indices = @transform_0, window_bounds = array<i64: 2, 4, 256>}, {pipeline_mode = #tpu.pipeline_mode<synchronous>, transform_indices = @transform_1, window_bounds = array<i64: 1, 4>}, {pipeline_mode = #tpu.pipeline_mode<synchronous>, transform_indices = @transform_2, window_bounds = array<i64: 1, 1>}, {pipeline_mode = #tpu.pipeline_mode<synchronous>, transform_indices = @transform_3, window_bounds = array<i64: 2, 4>}, {pipeline_mode = #tpu.pipeline_mode<synchronous>, transform_indices = @transform_4, window_bounds = array<i64: 2, 1>}, {pipeline_mode = #tpu.pipeline_mode<synchronous>, transform_indices = @transform_5, window_bounds = array<i64: 4, 2>}, {pipeline_mode = #tpu.pipeline_mode<synchronous>, transform_indices = @transform_6, window_bounds = array<i64: 4, 1>}, {pipeline_mode = #tpu.pipeline_mode<synchronous>, transform_indices = @transform_7, window_bounds = array<i64: 4, 1>}, {pipeline_mode = #tpu.pipeline_mode<synchronous>, transform_indices = @transform_8, window_bounds = array<i64: 4, 1>}, {transform_indices = @transform_9, window_bounds = array<i64: 2, 4, 256>}]} {
    %c0 = arith.constant 0 : index
    %c0_0 = arith.constant 0 : index
    %0 = vector.load %arg2[%c0, %c0_0] : memref<1x4xf32, #tpu.memory_space<vmem>>, vector<1x4xf32>
    %c0_1 = arith.constant 0 : index
    %c0_2 = arith.constant 0 : index
    %1 = vector.load %arg3[%c0_1, %c0_2] : memref<1x1xf32, #tpu.memory_space<vmem>>, vector<1x1xf32>
    %c0_3 = arith.constant 0 : index
    %c0_4 = arith.constant 0 : index
    %2 = vector.load %arg4[%c0_3, %c0_4] : memref<2x4xf32, #tpu.memory_space<vmem>>, vector<2x4xf32>
    %c0_5 = arith.constant 0 : index
    %c0_6 = arith.constant 0 : index
    %3 = vector.load %arg5[%c0_5, %c0_6] : memref<2x1xf32, #tpu.memory_space<vmem>>, vector<2x1xf32>
    %c0_7 = arith.constant 0 : index
    %c0_8 = arith.constant 0 : index
    %4 = vector.load %arg6[%c0_7, %c0_8] : memref<4x2xf32, #tpu.memory_space<vmem>>, vector<4x2xf32>
    %c0_9 = arith.constant 0 : index
    %c0_10 = arith.constant 0 : index
    %5 = vector.load %arg7[%c0_9, %c0_10] : memref<4x1xf32, #tpu.memory_space<vmem>>, vector<4x1xf32>
    %c0_11 = arith.constant 0 : index
    %c0_12 = arith.constant 0 : index
    %6 = vector.load %arg8[%c0_11, %c0_12] : memref<4x1xf32, #tpu.memory_space<vmem>>, vector<4x1xf32>
    %c0_13 = arith.constant 0 : index
    %c0_14 = arith.constant 0 : index
    %7 = vector.load %arg9[%c0_13, %c0_14] : memref<4x1xf32, #tpu.memory_space<vmem>>, vector<4x1xf32>
    %c0_15 = arith.constant 0 : index
    %c0_16 = arith.constant 0 : index
    %c0_17 = arith.constant 0 : index
    %8 = vector.load %arg1[%c0_15, %c0_16, %c0_17] : memref<2x4x256xf32, #tpu.memory_space<vmem>>, vector<1x4x256xf32>
    %9 = vector.shape_cast %8 : vector<1x4x256xf32> to vector<4x256xf32>
    %cst = arith.constant dense<0.000000e+00> : vector<1x256xf32>
    %10 = tpu.matmul %0, %9, %cst {dimension_numbers = #tpu.dot_dimension_numbers<[1], [0], [0], [1], [0, 0, 1, 1], [], []>} : vector<1x4xf32>, vector<4x256xf32>, vector<1x256xf32> -> vector<1x256xf32>
    %11 = vector.broadcast %1 : vector<1x1xf32> to vector<1x256xf32>
    %12 = arith.addf %10, %11 : vector<1x256xf32>
    %cst_18 = arith.constant dense<0xFF800000> : vector<1xf32>
    %13 = vector.multi_reduction <maximumf>, %12, %cst_18 [1] : vector<1x256xf32> to vector<1xf32>
    %14 = vector.shape_cast %13 : vector<1xf32> to vector<1x1xf32>
    %15 = vector.broadcast %14 : vector<1x1xf32> to vector<1x256xf32>
    %16 = arith.subf %12, %15 : vector<1x256xf32>
    %17 = math.exp %16 : vector<1x256xf32>
    %cst_19 = arith.constant dense<0.000000e+00> : vector<1xf32>
    %18 = vector.multi_reduction <add>, %17, %cst_19 [1] : vector<1x256xf32> to vector<1xf32>
    %19 = vector.shape_cast %18 : vector<1xf32> to vector<1x1xf32>
    %20 = tpu.reciprocal %19 {approx = true} : vector<1x1xf32> -> vector<1x1xf32>
    %21 = arith.mulf %19, %20 : vector<1x1xf32>
    %cst_20 = arith.constant 2.000000e+00 : f32
    %22 = vector.broadcast %cst_20 : f32 to vector<1x1xf32>
    %23 = arith.subf %22, %21 : vector<1x1xf32>
    %24 = arith.mulf %20, %23 : vector<1x1xf32>
    %25 = vector.broadcast %24 : vector<1x1xf32> to vector<1x256xf32>
    %26 = arith.mulf %17, %25 : vector<1x256xf32>
    %27 = vector.broadcast %26 : vector<1x256xf32> to vector<4x256xf32>
    %28 = arith.mulf %9, %27 : vector<4x256xf32>
    %cst_21 = arith.constant dense<0.000000e+00> : vector<4xf32>
    %29 = vector.multi_reduction <add>, %28, %cst_21 [1] : vector<4x256xf32> to vector<4xf32>
    %30 = vector.shape_cast %29 : vector<4xf32> to vector<4x1xf32>
    %cst_22 = arith.constant dense<0.000000e+00> : vector<2x1xf32>
    %31 = tpu.matmul %2, %30, %cst_22 {dimension_numbers = #tpu.dot_dimension_numbers<[1], [0], [0], [1], [0, 0, 1, 1], [], []>} : vector<2x4xf32>, vector<4x1xf32>, vector<2x1xf32> -> vector<2x1xf32>
    %32 = arith.addf %31, %3 : vector<2x1xf32>
    %cst_23 = arith.constant dense<0.000000e+00> : vector<4x1xf32>
    %33 = tpu.matmul %4, %32, %cst_23 {dimension_numbers = #tpu.dot_dimension_numbers<[1], [0], [0], [1], [0, 0, 1, 1], [], []>} : vector<4x2xf32>, vector<2x1xf32>, vector<4x1xf32> -> vector<4x1xf32>
    %34 = arith.addf %33, %5 : vector<4x1xf32>
    %cst_24 = arith.constant dense<0.000000e+00> : vector<1xf32>
    %35 = vector.multi_reduction <add>, %34, %cst_24 [0] : vector<4x1xf32> to vector<1xf32>
    %36 = vector.shape_cast %35 : vector<1xf32> to vector<1x1xf32>
    %cst_25 = arith.constant 4.000000e+00 : f32
    %37 = vector.broadcast %cst_25 : f32 to vector<1x1xf32>
    %38 = arith.divf %36, %37 : vector<1x1xf32>
    %39 = vector.broadcast %38 : vector<1x1xf32> to vector<4x1xf32>
    %40 = arith.subf %34, %39 : vector<4x1xf32>
    %41 = vector.broadcast %38 : vector<1x1xf32> to vector<4x1xf32>
    %42 = arith.subf %34, %41 : vector<4x1xf32>
    %43 = arith.mulf %40, %42 : vector<4x1xf32>
    %cst_26 = arith.constant dense<0.000000e+00> : vector<1xf32>
    %44 = vector.multi_reduction <add>, %43, %cst_26 [0] : vector<4x1xf32> to vector<1xf32>
    %45 = vector.shape_cast %44 : vector<1xf32> to vector<1x1xf32>
    %cst_27 = arith.constant 4.000000e+00 : f32
    %46 = vector.broadcast %cst_27 : f32 to vector<1x1xf32>
    %47 = arith.divf %45, %46 : vector<1x1xf32>
    %48 = vector.broadcast %38 : vector<1x1xf32> to vector<4x1xf32>
    %49 = arith.subf %34, %48 : vector<4x1xf32>
    %cst_28 = arith.constant 9.99999974E-6 : f32
    %50 = vector.broadcast %cst_28 : f32 to vector<1x1xf32>
    %51 = arith.addf %47, %50 : vector<1x1xf32>
    %52 = math.rsqrt %51 : vector<1x1xf32>
    %53 = vector.broadcast %52 : vector<1x1xf32> to vector<4x1xf32>
    %54 = arith.mulf %49, %53 : vector<4x1xf32>
    %55 = arith.mulf %54, %6 : vector<4x1xf32>
    %56 = arith.addf %55, %7 : vector<4x1xf32>
    %57 = arith.negf %56 : vector<4x1xf32>
    %58 = math.exp %57 : vector<4x1xf32>
    %cst_29 = arith.constant 1.000000e+00 : f32
    %59 = vector.broadcast %cst_29 : f32 to vector<4x1xf32>
    %60 = arith.addf %59, %58 : vector<4x1xf32>
    %61 = arith.divf %59, %60 : vector<4x1xf32>
    %62 = vector.broadcast %61 : vector<4x1xf32> to vector<4x256xf32>
    %63 = arith.mulf %9, %62 : vector<4x256xf32>
    %c0_30 = arith.constant 0 : index
    %c0_31 = arith.constant 0 : index
    %c0_32 = arith.constant 0 : index
    %64 = vector.load %arg10[%c0_30, %c0_31, %c0_32] : memref<2x4x256xf32, #tpu.memory_space<vmem>>, vector<1x4x256xf32>
    %65 = vector.shape_cast %64 : vector<1x4x256xf32> to vector<4x256xf32>
    %66 = vector.shape_cast %63 : vector<4x256xf32> to vector<1x4x256xf32>
    tpu.vector_store %arg10[%c0_30, %c0_31, %c0_32], %66 {strides = array<i32>} : memref<2x4x256xf32, #tpu.memory_space<vmem>>, vector<1x4x256xf32>,
    %c1 = arith.constant 1 : index
    %c0_33 = arith.constant 0 : index
    %c0_34 = arith.constant 0 : index
    %67 = vector.load %arg1[%c1, %c0_33, %c0_34] : memref<2x4x256xf32, #tpu.memory_space<vmem>>, vector<1x4x256xf32>
    %68 = vector.shape_cast %67 : vector<1x4x256xf32> to vector<4x256xf32>
    %cst_35 = arith.constant dense<0.000000e+00> : vector<1x256xf32>
    %69 = tpu.matmul %0, %68, %cst_35 {dimension_numbers = #tpu.dot_dimension_numbers<[1], [0], [0], [1], [0, 0, 1, 1], [], []>} : vector<1x4xf32>, vector<4x256xf32>, vector<1x256xf32> -> vector<1x256xf32>
    %70 = vector.broadcast %1 : vector<1x1xf32> to vector<1x256xf32>
    %71 = arith.addf %69, %70 : vector<1x256xf32>
    %cst_36 = arith.constant dense<0xFF800000> : vector<1xf32>
    %72 = vector.multi_reduction <maximumf>, %71, %cst_36 [1] : vector<1x256xf32> to vector<1xf32>
    %73 = vector.shape_cast %72 : vector<1xf32> to vector<1x1xf32>
    %74 = vector.broadcast %73 : vector<1x1xf32> to vector<1x256xf32>
    %75 = arith.subf %71, %74 : vector<1x256xf32>
    %76 = math.exp %75 : vector<1x256xf32>
    %cst_37 = arith.constant dense<0.000000e+00> : vector<1xf32>
    %77 = vector.multi_reduction <add>, %76, %cst_37 [1] : vector<1x256xf32> to vector<1xf32>
    %78 = vector.shape_cast %77 : vector<1xf32> to vector<1x1xf32>
    %79 = tpu.reciprocal %78 {approx = true} : vector<1x1xf32> -> vector<1x1xf32>
    %80 = arith.mulf %78, %79 : vector<1x1xf32>
    %cst_38 = arith.constant 2.000000e+00 : f32
    %81 = vector.broadcast %cst_38 : f32 to vector<1x1xf32>
    %82 = arith.subf %81, %80 : vector<1x1xf32>
    %83 = arith.mulf %79, %82 : vector<1x1xf32>
    %84 = vector.broadcast %83 : vector<1x1xf32> to vector<1x256xf32>
    %85 = arith.mulf %76, %84 : vector<1x256xf32>
    %86 = vector.broadcast %85 : vector<1x256xf32> to vector<4x256xf32>
    %87 = arith.mulf %68, %86 : vector<4x256xf32>
    %cst_39 = arith.constant dense<0.000000e+00> : vector<4xf32>
    %88 = vector.multi_reduction <add>, %87, %cst_39 [1] : vector<4x256xf32> to vector<4xf32>
    %89 = vector.shape_cast %88 : vector<4xf32> to vector<4x1xf32>
    %cst_40 = arith.constant dense<0.000000e+00> : vector<2x1xf32>
    %90 = tpu.matmul %2, %89, %cst_40 {dimension_numbers = #tpu.dot_dimension_numbers<[1], [0], [0], [1], [0, 0, 1, 1], [], []>} : vector<2x4xf32>, vector<4x1xf32>, vector<2x1xf32> -> vector<2x1xf32>
    %91 = arith.addf %90, %3 : vector<2x1xf32>
    %cst_41 = arith.constant dense<0.000000e+00> : vector<4x1xf32>
    %92 = tpu.matmul %4, %91, %cst_41 {dimension_numbers = #tpu.dot_dimension_numbers<[1], [0], [0], [1], [0, 0, 1, 1], [], []>} : vector<4x2xf32>, vector<2x1xf32>, vector<4x1xf32> -> vector<4x1xf32>
    %93 = arith.addf %92, %5 : vector<4x1xf32>
    %cst_42 = arith.constant dense<0.000000e+00> : vector<1xf32>
    %94 = vector.multi_reduction <add>, %93, %cst_42 [0] : vector<4x1xf32> to vector<1xf32>
    %95 = vector.shape_cast %94 : vector<1xf32> to vector<1x1xf32>
    %cst_43 = arith.constant 4.000000e+00 : f32
    %96 = vector.broadcast %cst_43 : f32 to vector<1x1xf32>
    %97 = arith.divf %95, %96 : vector<1x1xf32>
    %98 = vector.broadcast %97 : vector<1x1xf32> to vector<4x1xf32>
    %99 = arith.subf %93, %98 : vector<4x1xf32>
    %100 = vector.broadcast %97 : vector<1x1xf32> to vector<4x1xf32>
    %101 = arith.subf %93, %100 : vector<4x1xf32>
    %102 = arith.mulf %99, %101 : vector<4x1xf32>
    %cst_44 = arith.constant dense<0.000000e+00> : vector<1xf32>
    %103 = vector.multi_reduction <add>, %102, %cst_44 [0] : vector<4x1xf32> to vector<1xf32>
    %104 = vector.shape_cast %103 : vector<1xf32> to vector<1x1xf32>
    %cst_45 = arith.constant 4.000000e+00 : f32
    %105 = vector.broadcast %cst_45 : f32 to vector<1x1xf32>
    %106 = arith.divf %104, %105 : vector<1x1xf32>
    %107 = vector.broadcast %97 : vector<1x1xf32> to vector<4x1xf32>
    %108 = arith.subf %93, %107 : vector<4x1xf32>
    %cst_46 = arith.constant 9.99999974E-6 : f32
    %109 = vector.broadcast %cst_46 : f32 to vector<1x1xf32>
    %110 = arith.addf %106, %109 : vector<1x1xf32>
    %111 = math.rsqrt %110 : vector<1x1xf32>
    %112 = vector.broadcast %111 : vector<1x1xf32> to vector<4x1xf32>
    %113 = arith.mulf %108, %112 : vector<4x1xf32>
    %114 = arith.mulf %113, %6 : vector<4x1xf32>
    %115 = arith.addf %114, %7 : vector<4x1xf32>
    %116 = arith.negf %115 : vector<4x1xf32>
    %117 = math.exp %116 : vector<4x1xf32>
    %cst_47 = arith.constant 1.000000e+00 : f32
    %118 = vector.broadcast %cst_47 : f32 to vector<4x1xf32>
    %119 = arith.addf %118, %117 : vector<4x1xf32>
    %120 = arith.divf %118, %119 : vector<4x1xf32>
    %121 = vector.broadcast %120 : vector<4x1xf32> to vector<4x256xf32>
    %122 = arith.mulf %68, %121 : vector<4x256xf32>
    %c1_48 = arith.constant 1 : index
    %c0_49 = arith.constant 0 : index
    %c0_50 = arith.constant 0 : index
    %123 = vector.load %arg10[%c1_48, %c0_49, %c0_50] : memref<2x4x256xf32, #tpu.memory_space<vmem>>, vector<1x4x256xf32>
    %124 = vector.shape_cast %123 : vector<1x4x256xf32> to vector<4x256xf32>
    %125 = vector.shape_cast %122 : vector<4x256xf32> to vector<1x4x256xf32>
    tpu.vector_store %arg10[%c1_48, %c0_49, %c0_50], %125 {strides = array<i32>} : memref<2x4x256xf32, #tpu.memory_space<vmem>>, vector<1x4x256xf32>,
    return
  }
  func.func @transform_0(%arg0: i32) -> (i32, i32, i32) {
    %c0_i32 = arith.constant 0 : i32
    %c0_i32_0 = arith.constant 0 : i32
    %c0_i32_1 = arith.constant 0 : i32
    return %arg0, %c0_i32, %c0_i32_0 : i32, i32, i32
  }
  func.func @transform_1(%arg0: i32) -> (i32, i32) {
    %c0_i32 = arith.constant 0 : i32
    %c0_i32_0 = arith.constant 0 : i32
    %c0_i32_1 = arith.constant 0 : i32
    return %c0_i32, %c0_i32_0 : i32, i32
  }
  func.func @transform_2(%arg0: i32) -> (i32, i32) {
    %c0_i32 = arith.constant 0 : i32
    %c0_i32_0 = arith.constant 0 : i32
    %c0_i32_1 = arith.constant 0 : i32
    return %c0_i32, %c0_i32_0 : i32, i32
  }
  func.func @transform_3(%arg0: i32) -> (i32, i32) {
    %c0_i32 = arith.constant 0 : i32
    %c0_i32_0 = arith.constant 0 : i32
    %c0_i32_1 = arith.constant 0 : i32
    return %c0_i32, %c0_i32_0 : i32, i32
  }
  func.func @transform_4(%arg0: i32) -> (i32, i32) {
    %c0_i32 = arith.constant 0 : i32
    %c0_i32_0 = arith.constant 0 : i32
    %c0_i32_1 = arith.constant 0 : i32
    return %c0_i32, %c0_i32_0 : i32, i32
  }
  func.func @transform_5(%arg0: i32) -> (i32, i32) {
    %c0_i32 = arith.constant 0 : i32
    %c0_i32_0 = arith.constant 0 : i32
    %c0_i32_1 = arith.constant 0 : i32
    return %c0_i32, %c0_i32_0 : i32, i32
  }
  func.func @transform_6(%arg0: i32) -> (i32, i32) {
    %c0_i32 = arith.constant 0 : i32
    %c0_i32_0 = arith.constant 0 : i32
    %c0_i32_1 = arith.constant 0 : i32
    return %c0_i32, %c0_i32_0 : i32, i32
  }
  func.func @transform_7(%arg0: i32) -> (i32, i32) {
    %c0_i32 = arith.constant 0 : i32
    %c0_i32_0 = arith.constant 0 : i32
    %c0_i32_1 = arith.constant 0 : i32
    return %c0_i32, %c0_i32_0 : i32, i32
  }
  func.func @transform_8(%arg0: i32) -> (i32, i32) {
    %c0_i32 = arith.constant 0 : i32
    %c0_i32_0 = arith.constant 0 : i32
    %c0_i32_1 = arith.constant 0 : i32
    return %c0_i32, %c0_i32_0 : i32, i32
  }
  func.func @transform_9(%arg0: i32) -> (i32, i32, i32) {
    %c0_i32 = arith.constant 0 : i32
    %c0_i32_0 = arith.constant 0 : i32
    %c0_i32_1 = arith.constant 0 : i32
    return %arg0, %c0_i32, %c0_i32_0 : i32, i32, i32
  }
}

</mosaic_0001>

<llo_original>
// kernel: psa_channel_forward.1
$region0: #{psa_channel_forward.1}
  #allocation0 [shape = 'u32[]', space=smem, size = 0x4, offset = 0x4, fixed_abs, tag = 'smem constant byte address 0x4 - core index']
  #allocation1 [shape = 'u32[144,128]{1,0:T(1,128)}', space=vmem, size = 0x12000, scoped, tag = 'internal scratch']
  #allocation2 [shape = 'f32[1,1]{1,0:T(1,128)S(1)}', space=vmem, size = 0x200, scoped, tag = 'scoped memory for psa_channel_forward.1']
  %s0 = inlined_call_operand.vmem [shape: f32[2,4,256], index: 0, kind: input, shape index: {}]
  %s1 = inlined_call_operand.vmem [shape: f32[1,4], index: 1, kind: input, shape index: {}]
  %s2 = inlined_call_operand.<no memory space> [shape: f32[1,1], index: 2, kind: input, shape index: {}]
  %s3 = inlined_call_operand.vmem [shape: f32[2,4], index: 3, kind: input, shape index: {}]
  %s4 = inlined_call_operand.vmem [shape: f32[2,1], index: 4, kind: input, shape index: {}]
  %s5 = inlined_call_operand.vmem [shape: f32[4,2], index: 5, kind: input, shape index: {}]
  %s6 = inlined_call_operand.vmem [shape: f32[4,1], index: 6, kind: input, shape index: {}]
  %s7 = inlined_call_operand.vmem [shape: f32[4,1], index: 7, kind: input, shape index: {}]
  %s8 = inlined_call_operand.vmem [shape: f32[4,1], index: 8, kind: input, shape index: {}]
  %s9 = inlined_call_operand.vmem [shape: f32[2,4,256], index: 9, kind: output, shape index: {}]
  %s10 = sld [smem:[#allocation0]]
  $region46: #{psa_channel_forward.1} parent=0
    _
  %s12 = ssub.s32 1, %s10
  %s13 = scalar_select 0, %s12, %s10
  %v14 = vstv %s2
  %15 = vst [vmem:[#allocation2] sm:$0x1] %v14
  // Predicated region
  $region2: #{psa_channel_forward.1} parent=0 // pred_check
    _
  $region3: #{psa_channel_forward.1} parent=0 // pred_check_branch
    %17 = sbr.rel (0) target = $region5
  $region4: #{psa_channel_forward.1} parent=0 // pred_region
    _
  $region5: #{psa_channel_forward.1} parent=0 // pred_fallthru
    _
  // Predicated region
  $region6: #{psa_channel_forward.1} parent=0 // pred_check
    _
  $region7: #{psa_channel_forward.1} parent=0 // pred_check_branch
    %19 = sbr.rel (0) target = $region9
  $region8: #{psa_channel_forward.1} parent=0 // pred_region
    _
  $region9: #{psa_channel_forward.1} parent=0 // pred_fallthru
    _
  // Predicated region
  $region10: #{psa_channel_forward.1} parent=0 // pred_check
    _
  $region11: #{psa_channel_forward.1} parent=0 // pred_check_branch
    %21 = sbr.rel (0) target = $region13
  $region12: #{psa_channel_forward.1} parent=0 // pred_region
    _
  $region13: #{psa_channel_forward.1} parent=0 // pred_fallthru
    _
  // Predicated region
  $region14: #{psa_channel_forward.1} parent=0 // pred_check
    _
  $region15: #{psa_channel_forward.1} parent=0 // pred_check_branch
    %23 = sbr.rel (0) target = $region17
  $region16: #{psa_channel_forward.1} parent=0 // pred_region
    _
  $region17: #{psa_channel_forward.1} parent=0 // pred_fallthru
    _
  // Predicated region
  $region18: #{psa_channel_forward.1} parent=0 // pred_check
    _
  $region19: #{psa_channel_forward.1} parent=0 // pred_check_branch
    %25 = sbr.rel (0) target = $region21
  $region20: #{psa_channel_forward.1} parent=0 // pred_region
    _
  $region21: #{psa_channel_forward.1} parent=0 // pred_fallthru
    _
  // Predicated region
  $region22: #{psa_channel_forward.1} parent=0 // pred_check
    _
  $region23: #{psa_channel_forward.1} parent=0 // pred_check_branch
    %27 = sbr.rel (0) target = $region25
  $region24: #{psa_channel_forward.1} parent=0 // pred_region
    _
  $region25: #{psa_channel_forward.1} parent=0 // pred_fallthru
    _
  // Predicated region
  $region26: #{psa_channel_forward.1} parent=0 // pred_check
    _
  $region27: #{psa_channel_forward.1} parent=0 // pred_check_branch
    %29 = sbr.rel (0) target = $region29
  $region28: #{psa_channel_forward.1} parent=0 // pred_region
    _
  $region29: #{psa_channel_forward.1} parent=0 // pred_fallthru
    _
  // Predicated region
  $region30: #{psa_channel_forward.1} parent=0 // pred_check
    _
  $region31: #{psa_channel_forward.1} parent=0 // pred_check_branch
    %31 = sbr.rel (0) target = $region33
  $region32: #{psa_channel_forward.1} parent=0 // pred_region
    _
  $region33: #{psa_channel_forward.1} parent=0 // pred_fallthru
    _
  // Predicated region
  $region34: #{psa_channel_forward.1} parent=0 // pred_check
    _
  $region35: #{psa_channel_forward.1} parent=0 // pred_check_branch
    %33 = sbr.rel (0) target = $region37
  $region36: #{psa_channel_forward.1} parent=0 // pred_region
    _
  $region37: #{psa_channel_forward.1} parent=0 // pred_fallthru
    _
  %v34 = vld [vmem:[%s1] sm:$0x1]
  %v35 = vld [vmem:[#allocation2] sm:$0x1]
  %v36 = vld [vmem:[%s3] sm:$0x3]
  %v37 = vld [vmem:[%s4] sm:$0x3]
  %v38 = vld [vmem:[%s5] sm:$0xf]
  %v39 = vld [vmem:[%s6] sm:$0xf]
  %v40 = vld [vmem:[%s7] sm:$0xf]
  %v41 = vld [vmem:[%s8] sm:$0xf]
  %v42 = vld [vmem:[%s0] sm:$0xff]
  %44 = vset.pattern.permute.xlu0 0
  %45 = vperm.xlu0 %44, %v35
  %v46 = vpop.permute.xlu0 %45
  %v48 = vlaneseq
  %v49 = vshrl.u32 %v48, 7
  %v50 = vsub.s32 0, %v49
  %v51 = vrot.slane %v46, %v50
  %v53 = vcombine.high %v42, %v42
  %vm54 = vcmask 31744
  %v56 = vsel %vm54, %v34, 0
  %vm58 = vcmask 1043456
  %v59 = vsel %vm58, %v42, 0
  %v61 = vsel %vm58, %v53, 0
  %63 = vmatprep.subr.mxu0 0.0
  %64 = vmatpush1.msra.mxu0 0.0
  %65 = vmatprep.subr.mxu0 0.0
  %66 = vmatpush1.msra.mxu0 0.0
  %67 = vmatprep.subr.mxu0 0.0
  %68 = vmatpush1.msra.mxu0 0.0
  %69 = vmatprep.subr.mxu0 0.0
  %70 = vmatpush1.msra.mxu0 0.0
  %71 = vmatprep.subr.mxu0 0.0
  %72 = vmatpush1.msra.mxu0 0.0
  %73 = vmatprep.subr.mxu0 0.0
  %74 = vmatpush1.msra.mxu0 0.0
  %75 = vmatprep.subr.mxu0 0.0
  %76 = vmatpush1.msra.mxu0 0.0
  %77 = vmatprep.subr.mxu0 0.0
  %78 = vmatpush1.msra.mxu0 0.0
  %79 = vmatprep.subr.mxu0 0.0
  %80 = vmatpush1.msra.mxu0 0.0
  %81 = vmatprep.subr.mxu0 0.0
  %82 = vmatpush1.msra.mxu0 0.0
  %83 = vmatprep.subr.mxu0 0.0
  %84 = vmatpush1.msra.mxu0 0.0
  %85 = vmatprep.subr.mxu0 0.0
  %86 = vmatpush1.msra.mxu0 0.0
  %87 = vmatprep.subr.mxu0 0.0
  %88 = vmatpush1.msra.mxu0 0.0
  %89 = vmatprep.subr.mxu0 0.0
  %90 = vmatpush1.msra.mxu0 0.0
  %91 = vmatprep.subr.mxu0 0.0
  %92 = vmatpush1.msra.mxu0 0.0
  %93 = vmatprep.subr.mxu0 %v61
  %94 = vmatpush1.msra.mxu0 %v59
  %95 = vmatprep.subr.mxu0 0.0
  %96 = vmatpush2.msra.mxu0 0.0
  %97 = vmatprep.subr.mxu0 0.0
  %98 = vmatpush2.msra.mxu0 0.0
  %99 = vmatprep.subr.mxu0 0.0
  %100 = vmatpush2.msra.mxu0 0.0
  %101 = vmatprep.subr.mxu0 0.0
  %102 = vmatpush2.msra.mxu0 0.0
  %103 = vmatprep.subr.mxu0 0.0
  %104 = vmatpush2.msra.mxu0 0.0
  %105 = vmatprep.subr.mxu0 0.0
  %106 = vmatpush2.msra.mxu0 0.0
  %107 = vmatprep.subr.mxu0 0.0
  %108 = vmatpush2.msra.mxu0 0.0
  %109 = vmatprep.subr.mxu0 0.0
  %110 = vmatpush2.msra.mxu0 0.0
  %111 = vmatprep.subr.mxu0 0.0
  %112 = vmatpush2.msra.mxu0 0.0
  %113 = vmatprep.subr.mxu0 0.0
  %114 = vmatpush2.msra.mxu0 0.0
  %115 = vmatprep.subr.mxu0 0.0
  %116 = vmatpush2.msra.mxu0 0.0
  %117 = vmatprep.subr.mxu0 0.0
  %118 = vmatpush2.msra.mxu0 0.0
  %119 = vmatprep.subr.mxu0 0.0
  %120 = vmatpush2.msra.mxu0 0.0
  %121 = vmatprep.subr.mxu0 0.0
  %122 = vmatpush2.msra.mxu0 0.0
  %123 = vmatprep.subr.mxu0 0.0
  %124 = vmatpush2.msra.mxu0 0.0
  %125 = vmatprep.subr.mxu0 0.0
  %126 = vmatpush2.msra.mxu0 0.0
  %127 = vmatprep.mubr.f32.mxu0 0.0
  %128 = vmatmul.mubr.f32.gmra.mxu0 %v56
  %v129 = vpop.f32.mrf.mxu0
  %v130 = vadd.f32 %v51, %v129
  %v131 = vpop.f32.mrf.mxu0
  %v132 = vadd.f32 %v51, %v131
  %133 = vdwg.mxu0
  %vm134 = vcmask 1040384
  %v135 = vsel %vm134, %v130, -inf
  %v136 = vsel %vm134, %v132, -inf
  %v137 = vmax.f32 %v135, %v136
  %138 = vmax.xlane.f32.xlu0 %v137
  %v139 = vpop.xlane.xlu0 %138
  %v140 = vsub.f32 %v130, %v139
  %v141 = vsub.f32 %v132, %v139
  %v142 = vmul.f32 %v140, 1.442695
  %v143 = vpow.pop %v142
  %v144 = vmul.f32 %v141, 1.442695
  %v145 = vpow.pop %v144
  %v146 = vsel %vm134, %v143, 0.0
  %v147 = vsel %vm134, %v145, 0.0
  %v148 = vadd.f32 %v146, %v147
  %149 = vadd.xlane.f32.xlu0 %v148
  %v150 = vpop.xlane.xlu0 %149
  %v151 = vrcp.pop %v150
  %v152 = vmul.f32 %v150, %v151
  %v153 = vsub.f32 2.0, %v152
  %v154 = vmul.f32 %v151, %v153
  %v155 = vmul.f32 %v143, %v154
  %v156 = vmul.f32 %v145, %v154
  %v157 = vlaneseq
  %v158 = vshrl.u32 %v157, 7
  %v159 = vsub.s32 0, %v158
  %v160 = vrot.slane %v155, %v159
  %v161 = vlaneseq
  %v162 = vshrl.u32 %v161, 7
  %v163 = vsub.s32 0, %v162
  %v164 = vrot.slane %v156, %v163
  %v167 = vcombine.low %v160, %v164
  %v169 = vmul.f32 %v42, %v167
  %v171 = vcombine.high %v169, %v169
  %v173 = vsel %vm58, %v169, 0.0
  %v174 = vsel %vm58, %v171, 0.0
  %v175 = vadd.f32 %v173, %v174
  %176 = vadd.xlane.f32.xlu0 %v175
  %v177 = vpop.xlane.xlu0 %176
  %v179 = vsel %vm54, %v36, 0
  %v182 = vsel %vm58, %v177, 0
  %184 = vmatprep.subr.mxu0 0.0
  %185 = vmatpush1.msra.mxu0 0.0
  %186 = vmatprep.subr.mxu0 0.0
  %187 = vmatpush1.msra.mxu0 0.0
  %188 = vmatprep.subr.mxu0 0.0
  %189 = vmatpush1.msra.mxu0 0.0
  %190 = vmatprep.subr.mxu0 0.0
  %191 = vmatpush1.msra.mxu0 0.0
  %192 = vmatprep.subr.mxu0 0.0
  %193 = vmatpush1.msra.mxu0 0.0
  %194 = vmatprep.subr.mxu0 0.0
  %195 = vmatpush1.msra.mxu0 0.0
  %196 = vmatprep.subr.mxu0 0.0
  %197 = vmatpush1.msra.mxu0 0.0
  %198 = vmatprep.subr.mxu0 0.0
  %199 = vmatpush1.msra.mxu0 0.0
  %200 = vmatprep.subr.mxu0 0.0
  %201 = vmatpush1.msra.mxu0 0.0
  %202 = vmatprep.subr.mxu0 0.0
  %203 = vmatpush1.msra.mxu0 0.0
  %204 = vmatprep.subr.mxu0 0.0
  %205 = vmatpush1.msra.mxu0 0.0
  %206 = vmatprep.subr.mxu0 0.0
  %207 = vmatpush1.msra.mxu0 0.0
  %208 = vmatprep.subr.mxu0 0.0
  %209 = vmatpush1.msra.mxu0 0.0
  %210 = vmatprep.subr.mxu0 0.0
  %211 = vmatpush1.msra.mxu0 0.0
  %212 = vmatprep.subr.mxu0 0.0
  %213 = vmatpush1.msra.mxu0 0.0
  %214 = vmatprep.subr.mxu0 0.0
  %215 = vmatpush1.msra.mxu0 %v182
  %216 = vmatprep.subr.mxu0 0.0
  %217 = vmatpush2.msra.mxu0 0.0
  %218 = vmatprep.subr.mxu0 0.0
  %219 = vmatpush2.msra.mxu0 0.0
  %220 = vmatprep.subr.mxu0 0.0
  %221 = vmatpush2.msra.mxu0 0.0
  %222 = vmatprep.subr.mxu0 0.0
  %223 = vmatpush2.msra.mxu0 0.0
  %224 = vmatprep.subr.mxu0 0.0
  %225 = vmatpush2.msra.mxu0 0.0
  %226 = vmatprep.subr.mxu0 0.0
  %227 = vmatpush2.msra.mxu0 0.0
  %228 = vmatprep.subr.mxu0 0.0
  %229 = vmatpush2.msra.mxu0 0.0
  %230 = vmatprep.subr.mxu0 0.0
  %231 = vmatpush2.msra.mxu0 0.0
  %232 = vmatprep.subr.mxu0 0.0
  %233 = vmatpush2.msra.mxu0 0.0
  %234 = vmatprep.subr.mxu0 0.0
  %235 = vmatpush2.msra.mxu0 0.0
  %236 = vmatprep.subr.mxu0 0.0
  %237 = vmatpush2.msra.mxu0 0.0
  %238 = vmatprep.subr.mxu0 0.0
  %239 = vmatpush2.msra.mxu0 0.0
  %240 = vmatprep.subr.mxu0 0.0
  %241 = vmatpush2.msra.mxu0 0.0
  %242 = vmatprep.subr.mxu0 0.0
  %243 = vmatpush2.msra.mxu0 0.0
  %244 = vmatprep.subr.mxu0 0.0
  %245 = vmatpush2.msra.mxu0 0.0
  %246 = vmatprep.subr.mxu0 0.0
  %247 = vmatpush2.msra.mxu0 0.0
  %248 = vmatprep.mubr.f32.mxu0 0.0
  %249 = vmatmul.mubr.f32.gmra.mxu0 %v179
  %v250 = vpop.f32.mrf.mxu0
  %v251 = vadd.f32 %v37, %v250
  %v252 = vpop.f32.mrf.mxu0
  %253 = vdwg.mxu0
  %vm254 = vcmask 15360
  %v256 = vsel %vm254, %v38, 0
  %vm258 = vcmask 1041408
  %v260 = vsel %vm258, %v251, 0
  %262 = vmatprep.subr.mxu0 0.0
  %263 = vmatpush1.msra.mxu0 0.0
  %264 = vmatprep.subr.mxu0 0.0
  %265 = vmatpush1.msra.mxu0 0.0
  %266 = vmatprep.subr.mxu0 0.0
  %267 = vmatpush1.msra.mxu0 0.0
  %268 = vmatprep.subr.mxu0 0.0
  %269 = vmatpush1.msra.mxu0 0.0
  %270 = vmatprep.subr.mxu0 0.0
  %271 = vmatpush1.msra.mxu0 0.0
  %272 = vmatprep.subr.mxu0 0.0
  %273 = vmatpush1.msra.mxu0 0.0
  %274 = vmatprep.subr.mxu0 0.0
  %275 = vmatpush1.msra.mxu0 0.0
  %276 = vmatprep.subr.mxu0 0.0
  %277 = vmatpush1.msra.mxu0 0.0
  %278 = vmatprep.subr.mxu0 0.0
  %279 = vmatpush1.msra.mxu0 0.0
  %280 = vmatprep.subr.mxu0 0.0
  %281 = vmatpush1.msra.mxu0 0.0
  %282 = vmatprep.subr.mxu0 0.0
  %283 = vmatpush1.msra.mxu0 0.0
  %284 = vmatprep.subr.mxu0 0.0
  %285 = vmatpush1.msra.mxu0 0.0
  %286 = vmatprep.subr.mxu0 0.0
  %287 = vmatpush1.msra.mxu0 0.0
  %288 = vmatprep.subr.mxu0 0.0
  %289 = vmatpush1.msra.mxu0 0.0
  %290 = vmatprep.subr.mxu0 0.0
  %291 = vmatpush1.msra.mxu0 0.0
  %292 = vmatprep.subr.mxu0 0.0
  %293 = vmatpush1.msra.mxu0 %v260
  %294 = vmatprep.subr.mxu0 0.0
  %295 = vmatpush2.msra.mxu0 0.0
  %296 = vmatprep.subr.mxu0 0.0
  %297 = vmatpush2.msra.mxu0 0.0
  %298 = vmatprep.subr.mxu0 0.0
  %299 = vmatpush2.msra.mxu0 0.0
  %300 = vmatprep.subr.mxu0 0.0
  %301 = vmatpush2.msra.mxu0 0.0
  %302 = vmatprep.subr.mxu0 0.0
  %303 = vmatpush2.msra.mxu0 0.0
  %304 = vmatprep.subr.mxu0 0.0
  %305 = vmatpush2.msra.mxu0 0.0
  %306 = vmatprep.subr.mxu0 0.0
  %307 = vmatpush2.msra.mxu0 0.0
  %308 = vmatprep.subr.mxu0 0.0
  %309 = vmatpush2.msra.mxu0 0.0
  %310 = vmatprep.subr.mxu0 0.0
  %311 = vmatpush2.msra.mxu0 0.0
  %312 = vmatprep.subr.mxu0 0.0
  %313 = vmatpush2.msra.mxu0 0.0
  %314 = vmatprep.subr.mxu0 0.0
  %315 = vmatpush2.msra.mxu0 0.0
  %316 = vmatprep.subr.mxu0 0.0
  %317 = vmatpush2.msra.mxu0 0.0
  %318 = vmatprep.subr.mxu0 0.0
  %319 = vmatpush2.msra.mxu0 0.0
  %320 = vmatprep.subr.mxu0 0.0
  %321 = vmatpush2.msra.mxu0 0.0
  %322 = vmatprep.subr.mxu0 0.0
  %323 = vmatpush2.msra.mxu0 0.0
  %324 = vmatprep.subr.mxu0 0.0
  %325 = vmatpush2.msra.mxu0 0.0
  %326 = vmatprep.mubr.f32.mxu0 0.0
  %327 = vmatmul.mubr.f32.gmra.mxu0 %v256
  %v328 = vpop.f32.mrf.mxu0
  %v329 = vadd.f32 %v39, %v328
  %v330 = vpop.f32.mrf.mxu0
  %331 = vdwg.mxu0
  %vm332 = vcmask 3072
  %v333 = vsel %vm332, %v329, 0.0
  %v334 = vrot.slane %v333, 4
  %v335 = vadd.f32 %v333, %v334
  %v336 = vrot.slane %v335, 2
  %v337 = vadd.f32 %v335, %v336
  %v338 = vrot.slane %v337, 1
  %v339 = vadd.f32 %v337, %v338
  %v340 = vrcp.pop 4.0
  %v341 = vmul.f32 %v339, %v340
  %v342 = vsub.f32 %v329, %v341
  %v343 = vmul.f32 %v342, %v342
  %v344 = vsel %vm332, %v343, 0.0
  %v345 = vrot.slane %v344, 4
  %v346 = vadd.f32 %v344, %v345
  %v347 = vrot.slane %v346, 2
  %v348 = vadd.f32 %v346, %v347
  %v349 = vrot.slane %v348, 1
  %v350 = vadd.f32 %v348, %v349
  %v351 = vmul.f32 %v350, %v340
  %v352 = vadd.f32 %v351, 1e-05
  %v353 = vrsqrt.pop %v352
  %v354 = vmul.f32 %v342, %v353
  %v355 = vmul.f32 %v354, %v40
  %v356 = vadd.f32 %v355, %v41
  %v357 = vxor.u32 %v356, 2147483648
  %v358 = vmul.f32 %v357, 1.442695
  %v359 = vpow.pop %v358
  %v360 = vadd.f32 %v359, 1.0
  %v361 = vrcp.pop %v360
  %v362 = vmul.f32 1.0, %v361
  %364 = vset.pattern.permute.xlu0 0
  %365 = vperm.xlu0 %364, %v362
  %v366 = vpop.permute.xlu0 %365
  %v368 = vunpack.c.l.s4 839922192
  %v369 = vunpack.c.0.s8 %v368
  %v370 = vlaneseq
  %v371 = vshrl.u32 %v370, 7
  %v372 = vsub.s32 %v369, %v371
  %v373 = vrot.slane %v366, %v372
  %v375 = vmul.f32 %v42, %v373
  %376 = vst [vmem:[%s9] sm:$0xff] %v375
  %s377 = scalar_lea.vmem %s0, 8
  %v378 = vld [vmem:[%s377] sm:$0xff]
  %v380 = vcombine.high %v378, %v378
  %v381 = vsel %vm58, %v378, 0
  %v383 = vsel %vm58, %v380, 0
  %385 = vmatprep.subr.mxu0 0.0
  %386 = vmatpush1.msra.mxu0 0.0
  %387 = vmatprep.subr.mxu0 0.0
  %388 = vmatpush1.msra.mxu0 0.0
  %389 = vmatprep.subr.mxu0 0.0
  %390 = vmatpush1.msra.mxu0 0.0
  %391 = vmatprep.subr.mxu0 0.0
  %392 = vmatpush1.msra.mxu0 0.0
  %393 = vmatprep.subr.mxu0 0.0
  %394 = vmatpush1.msra.mxu0 0.0
  %395 = vmatprep.subr.mxu0 0.0
  %396 = vmatpush1.msra.mxu0 0.0
  %397 = vmatprep.subr.mxu0 0.0
  %398 = vmatpush1.msra.mxu0 0.0
  %399 = vmatprep.subr.mxu0 0.0
  %400 = vmatpush1.msra.mxu0 0.0
  %401 = vmatprep.subr.mxu0 0.0
  %402 = vmatpush1.msra.mxu0 0.0
  %403 = vmatprep.subr.mxu0 0.0
  %404 = vmatpush1.msra.mxu0 0.0
  %405 = vmatprep.subr.mxu0 0.0
  %406 = vmatpush1.msra.mxu0 0.0
  %407 = vmatprep.subr.mxu0 0.0
  %408 = vmatpush1.msra.mxu0 0.0
  %409 = vmatprep.subr.mxu0 0.0
  %410 = vmatpush1.msra.mxu0 0.0
  %411 = vmatprep.subr.mxu0 0.0
  %412 = vmatpush1.msra.mxu0 0.0
  %413 = vmatprep.subr.mxu0 0.0
  %414 = vmatpush1.msra.mxu0 0.0
  %415 = vmatprep.subr.mxu0 %v383
  %416 = vmatpush1.msra.mxu0 %v381
  %417 = vmatprep.subr.mxu0 0.0
  %418 = vmatpush2.msra.mxu0 0.0
  %419 = vmatprep.subr.mxu0 0.0
  %420 = vmatpush2.msra.mxu0 0.0
  %421 = vmatprep.subr.mxu0 0.0
  %422 = vmatpush2.msra.mxu0 0.0
  %423 = vmatprep.subr.mxu0 0.0
  %424 = vmatpush2.msra.mxu0 0.0
  %425 = vmatprep.subr.mxu0 0.0
  %426 = vmatpush2.msra.mxu0 0.0
  %427 = vmatprep.subr.mxu0 0.0
  %428 = vmatpush2.msra.mxu0 0.0
  %429 = vmatprep.subr.mxu0 0.0
  %430 = vmatpush2.msra.mxu0 0.0
  %431 = vmatprep.subr.mxu0 0.0
  %432 = vmatpush2.msra.mxu0 0.0
  %433 = vmatprep.subr.mxu0 0.0
  %434 = vmatpush2.msra.mxu0 0.0
  %435 = vmatprep.subr.mxu0 0.0
  %436 = vmatpush2.msra.mxu0 0.0
  %437 = vmatprep.subr.mxu0 0.0
  %438 = vmatpush2.msra.mxu0 0.0
  %439 = vmatprep.subr.mxu0 0.0
  %440 = vmatpush2.msra.mxu0 0.0
  %441 = vmatprep.subr.mxu0 0.0
  %442 = vmatpush2.msra.mxu0 0.0
  %443 = vmatprep.subr.mxu0 0.0
  %444 = vmatpush2.msra.mxu0 0.0
  %445 = vmatprep.subr.mxu0 0.0
  %446 = vmatpush2.msra.mxu0 0.0
  %447 = vmatprep.subr.mxu0 0.0
  %448 = vmatpush2.msra.mxu0 0.0
  %449 = vmatprep.mubr.f32.mxu0 0.0
  %450 = vmatmul.mubr.f32.gmra.mxu0 %v56
  %v451 = vpop.f32.mrf.mxu0
  %v452 = vadd.f32 %v51, %v451
  %v453 = vpop.f32.mrf.mxu0
  %v454 = vadd.f32 %v51, %v453
  %455 = vdwg.mxu0
  %v456 = vsel %vm134, %v452, -inf
  %v457 = vsel %vm134, %v454, -inf
  %v458 = vmax.f32 %v456, %v457
  %459 = vmax.xlane.f32.xlu0 %v458
  %v460 = vpop.xlane.xlu0 %459
  %v461 = vsub.f32 %v452, %v460
  %v462 = vsub.f32 %v454, %v460
  %v463 = vmul.f32 %v461, 1.442695
  %v464 = vpow.pop %v463
  %v465 = vmul.f32 %v462, 1.442695
  %v466 = vpow.pop %v465
  %v467 = vsel %vm134, %v464, 0.0
  %v468 = vsel %vm134, %v466, 0.0
  %v469 = vadd.f32 %v467, %v468
  %470 = vadd.xlane.f32.xlu0 %v469
  %v471 = vpop.xlane.xlu0 %470
  %v472 = vrcp.pop %v471
  %v473 = vmul.f32 %v471, %v472
  %v474 = vsub.f32 2.0, %v473
  %v475 = vmul.f32 %v472, %v474
  %v476 = vmul.f32 %v464, %v475
  %v477 = vmul.f32 %v466, %v475
  %v478 = vlaneseq
  %v479 = vshrl.u32 %v478, 7
  %v480 = vsub.s32 0, %v479
  %v481 = vrot.slane %v476, %v480
  %v482 = vlaneseq
  %v483 = vshrl.u32 %v482, 7
  %v484 = vsub.s32 0, %v483
  %v485 = vrot.slane %v477, %v484
  %v488 = vcombine.low %v481, %v485
  %v490 = vmul.f32 %v378, %v488
  %v492 = vcombine.high %v490, %v490
  %v494 = vsel %vm58, %v490, 0.0
  %v495 = vsel %vm58, %v492, 0.0
  %v496 = vadd.f32 %v494, %v495
  %497 = vadd.xlane.f32.xlu0 %v496
  %v498 = vpop.xlane.xlu0 %497
  %v500 = vsel %vm58, %v498, 0
  %502 = vmatprep.subr.mxu0 0.0
  %503 = vmatpush1.msra.mxu0 0.0
  %504 = vmatprep.subr.mxu0 0.0
  %505 = vmatpush1.msra.mxu0 0.0
  %506 = vmatprep.subr.mxu0 0.0
  %507 = vmatpush1.msra.mxu0 0.0
  %508 = vmatprep.subr.mxu0 0.0
  %509 = vmatpush1.msra.mxu0 0.0
  %510 = vmatprep.subr.mxu0 0.0
  %511 = vmatpush1.msra.mxu0 0.0
  %512 = vmatprep.subr.mxu0 0.0
  %513 = vmatpush1.msra.mxu0 0.0
  %514 = vmatprep.subr.mxu0 0.0
  %515 = vmatpush1.msra.mxu0 0.0
  %516 = vmatprep.subr.mxu0 0.0
  %517 = vmatpush1.msra.mxu0 0.0
  %518 = vmatprep.subr.mxu0 0.0
  %519 = vmatpush1.msra.mxu0 0.0
  %520 = vmatprep.subr.mxu0 0.0
  %521 = vmatpush1.msra.mxu0 0.0
  %522 = vmatprep.subr.mxu0 0.0
  %523 = vmatpush1.msra.mxu0 0.0
  %524 = vmatprep.subr.mxu0 0.0
  %525 = vmatpush1.msra.mxu0 0.0
  %526 = vmatprep.subr.mxu0 0.0
  %527 = vmatpush1.msra.mxu0 0.0
  %528 = vmatprep.subr.mxu0 0.0
  %529 = vmatpush1.msra.mxu0 0.0
  %530 = vmatprep.subr.mxu0 0.0
  %531 = vmatpush1.msra.mxu0 0.0
  %532 = vmatprep.subr.mxu0 0.0
  %533 = vmatpush1.msra.mxu0 %v500
  %534 = vmatprep.subr.mxu0 0.0
  %535 = vmatpush2.msra.mxu0 0.0
  %536 = vmatprep.subr.mxu0 0.0
  %537 = vmatpush2.msra.mxu0 0.0
  %538 = vmatprep.subr.mxu0 0.0
  %539 = vmatpush2.msra.mxu0 0.0
  %540 = vmatprep.subr.mxu0 0.0
  %541 = vmatpush2.msra.mxu0 0.0
  %542 = vmatprep.subr.mxu0 0.0
  %543 = vmatpush2.msra.mxu0 0.0
  %544 = vmatprep.subr.mxu0 0.0
  %545 = vmatpush2.msra.mxu0 0.0
  %546 = vmatprep.subr.mxu0 0.0
  %547 = vmatpush2.msra.mxu0 0.0
  %548 = vmatprep.subr.mxu0 0.0
  %549 = vmatpush2.msra.mxu0 0.0
  %550 = vmatprep.subr.mxu0 0.0
  %551 = vmatpush2.msra.mxu0 0.0
  %552 = vmatprep.subr.mxu0 0.0
  %553 = vmatpush2.msra.mxu0 0.0
  %554 = vmatprep.subr.mxu0 0.0
  %555 = vmatpush2.msra.mxu0 0.0
  %556 = vmatprep.subr.mxu0 0.0
  %557 = vmatpush2.msra.mxu0 0.0
  %558 = vmatprep.subr.mxu0 0.0
  %559 = vmatpush2.msra.mxu0 0.0
  %560 = vmatprep.subr.mxu0 0.0
  %561 = vmatpush2.msra.mxu0 0.0
  %562 = vmatprep.subr.mxu0 0.0
  %563 = vmatpush2.msra.mxu0 0.0
  %564 = vmatprep.subr.mxu0 0.0
  %565 = vmatpush2.msra.mxu0 0.0
  %566 = vmatprep.mubr.f32.mxu0 0.0
  %567 = vmatmul.mubr.f32.gmra.mxu0 %v179
  %v568 = vpop.f32.mrf.mxu0
  %v569 = vadd.f32 %v37, %v568
  %v570 = vpop.f32.mrf.mxu0
  %571 = vdwg.mxu0
  %v573 = vsel %vm258, %v569, 0
  %575 = vmatprep.subr.mxu0 0.0
  %576 = vmatpush1.msra.mxu0 0.0
  %577 = vmatprep.subr.mxu0 0.0
  %578 = vmatpush1.msra.mxu0 0.0
  %579 = vmatprep.subr.mxu0 0.0
  %580 = vmatpush1.msra.mxu0 0.0
  %581 = vmatprep.subr.mxu0 0.0
  %582 = vmatpush1.msra.mxu0 0.0
  %583 = vmatprep.subr.mxu0 0.0
  %584 = vmatpush1.msra.mxu0 0.0
  %585 = vmatprep.subr.mxu0 0.0
  %586 = vmatpush1.msra.mxu0 0.0
  %587 = vmatprep.subr.mxu0 0.0
  %588 = vmatpush1.msra.mxu0 0.0
  %589 = vmatprep.subr.mxu0 0.0
  %590 = vmatpush1.msra.mxu0 0.0
  %591 = vmatprep.subr.mxu0 0.0
  %592 = vmatpush1.msra.mxu0 0.0
  %593 = vmatprep.subr.mxu0 0.0
  %594 = vmatpush1.msra.mxu0 0.0
  %595 = vmatprep.subr.mxu0 0.0
  %596 = vmatpush1.msra.mxu0 0.0
  %597 = vmatprep.subr.mxu0 0.0
  %598 = vmatpush1.msra.mxu0 0.0
  %599 = vmatprep.subr.mxu0 0.0
  %600 = vmatpush1.msra.mxu0 0.0
  %601 = vmatprep.subr.mxu0 0.0
  %602 = vmatpush1.msra.mxu0 0.0
  %603 = vmatprep.subr.mxu0 0.0
  %604 = vmatpush1.msra.mxu0 0.0
  %605 = vmatprep.subr.mxu0 0.0
  %606 = vmatpush1.msra.mxu0 %v573
  %607 = vmatprep.subr.mxu0 0.0
  %608 = vmatpush2.msra.mxu0 0.0
  %609 = vmatprep.subr.mxu0 0.0
  %610 = vmatpush2.msra.mxu0 0.0
  %611 = vmatprep.subr.mxu0 0.0
  %612 = vmatpush2.msra.mxu0 0.0
  %613 = vmatprep.subr.mxu0 0.0
  %614 = vmatpush2.msra.mxu0 0.0
  %615 = vmatprep.subr.mxu0 0.0
  %616 = vmatpush2.msra.mxu0 0.0
  %617 = vmatprep.subr.mxu0 0.0
  %618 = vmatpush2.msra.mxu0 0.0
  %619 = vmatprep.subr.mxu0 0.0
  %620 = vmatpush2.msra.mxu0 0.0
  %621 = vmatprep.subr.mxu0 0.0
  %622 = vmatpush2.msra.mxu0 0.0
  %623 = vmatprep.subr.mxu0 0.0
  %624 = vmatpush2.msra.mxu0 0.0
  %625 = vmatprep.subr.mxu0 0.0
  %626 = vmatpush2.msra.mxu0 0.0
  %627 = vmatprep.subr.mxu0 0.0
  %628 = vmatpush2.msra.mxu0 0.0
  %629 = vmatprep.subr.mxu0 0.0
  %630 = vmatpush2.msra.mxu0 0.0
  %631 = vmatprep.subr.mxu0 0.0
  %632 = vmatpush2.msra.mxu0 0.0
  %633 = vmatprep.subr.mxu0 0.0
  %634 = vmatpush2.msra.mxu0 0.0
  %635 = vmatprep.subr.mxu0 0.0
  %636 = vmatpush2.msra.mxu0 0.0
  %637 = vmatprep.subr.mxu0 0.0
  %638 = vmatpush2.msra.mxu0 0.0
  %639 = vmatprep.mubr.f32.mxu0 0.0
  %640 = vmatmul.mubr.f32.gmra.mxu0 %v256
  %v641 = vpop.f32.mrf.mxu0
  %v642 = vadd.f32 %v39, %v641
  %v643 = vpop.f32.mrf.mxu0
  %644 = vdwg.mxu0
  %v645 = vsel %vm332, %v642, 0.0
  %v646 = vrot.slane %v645, 4
  %v647 = vadd.f32 %v645, %v646
  %v648 = vrot.slane %v647, 2
  %v649 = vadd.f32 %v647, %v648
  %v650 = vrot.slane %v649, 1
  %v651 = vadd.f32 %v649, %v650
  %v652 = vmul.f32 %v651, %v340
  %v653 = vsub.f32 %v642, %v652
  %v654 = vmul.f32 %v653, %v653
  %v655 = vsel %vm332, %v654, 0.0
  %v656 = vrot.slane %v655, 4
  %v657 = vadd.f32 %v655, %v656
  %v658 = vrot.slane %v657, 2
  %v659 = vadd.f32 %v657, %v658
  %v660 = vrot.slane %v659, 1
  %v661 = vadd.f32 %v659, %v660
  %v662 = vmul.f32 %v661, %v340
  %v663 = vadd.f32 %v662, 1e-05
  %v664 = vrsqrt.pop %v663
  %v665 = vmul.f32 %v653, %v664
  %v666 = vmul.f32 %v665, %v40
  %v667 = vadd.f32 %v666, %v41
  %v668 = vxor.u32 %v667, 2147483648
  %v669 = vmul.f32 %v668, 1.442695
  %v670 = vpow.pop %v669
  %v671 = vadd.f32 %v670, 1.0
  %v672 = vrcp.pop %v671
  %v673 = vmul.f32 1.0, %v672
  %675 = vset.pattern.permute.xlu0 0
  %676 = vperm.xlu0 %675, %v673
  %v677 = vpop.permute.xlu0 %676
  %v679 = vunpack.c.l.s4 839922192
  %v680 = vunpack.c.0.s8 %v679
  %v681 = vlaneseq
  %v682 = vshrl.u32 %v681, 7
  %v683 = vsub.s32 %v680, %v682
  %v684 = vrot.slane %v677, %v683
  %v686 = vmul.f32 %v378, %v684
  %s687 = scalar_lea.vmem %s9, 8
  %688 = vst [vmem:[%s687] sm:$0xff] %v686
  // Predicated region
  $region38: #{psa_channel_forward.1} parent=0 // pred_check
    _
  $region39: #{psa_channel_forward.1} parent=0 // pred_check_branch
    %690 = sbr.rel (0) target = $region41
  $region40: #{psa_channel_forward.1} parent=0 // pred_region
    _
  $region41: #{psa_channel_forward.1} parent=0 // pred_fallthru
    _
  // Predicated region
  $region42: #{psa_channel_forward.1} parent=0 // pred_check
    _
  $region43: #{psa_channel_forward.1} parent=0 // pred_check_branch
    %692 = sbr.rel (0) target = $region45
  $region44: #{psa_channel_forward.1} parent=0 // pred_region
    _
  $region45: #{psa_channel_forward.1} parent=0 // pred_fallthru
    _

</llo_original>
